<compile_context>
chip_gen: v7x
topology: tpu7x:2x2x1
jax: 0.10.0
libtpu: 0.0.40
codegen_flags: <defaults>
</compile_context>

<pallas_src>
import numpy as np
import jax
import jax.numpy as jnp
from jax.experimental import pallas as pl
from jax.experimental.pallas import tpu as pltpu

VOCAB = 16  # nn.Embedding(16, d_model)


def _round_up(x: int, m: int) -> int:
    return ((x + m - 1) // m) * m


def _make_kernel(chunk_rows: int, num_chunks: int, vocab: int):
    """Kernel over one (tile_rows, G*d_model) output tile, chunked internally."""

    def kernel(idx_ref, tab_ref, out_ref):
        # idx_ref: (TR, G)              int32, values in [0, vocab)
        # tab_ref: (G*vocab, G*d_model) block-diagonal replicated embedding table
        # out_ref: (TR, G*d_model)      lane-dense output tile
        g = idx_ref.shape[1]

        def compute_chunk(r0):
            idx = idx_ref[pl.ds(r0, chunk_rows), :]                       # (CR, G)
            lane = jax.lax.broadcasted_iota(
                jnp.int32, (chunk_rows, g * vocab), 1)                    # (CR, G*16)
            # onehot[r, gg*vocab + idx[r, gg]] = 1   (built in table dtype)
            onehot = (lane == idx[:, 0:1]).astype(tab_ref.dtype)
            for gg in range(1, g):                                        # static, G<=16
                shifted = idx[:, gg:gg + 1] + gg * vocab                  # (CR, 1)
                onehot = onehot + (lane == shifted).astype(tab_ref.dtype)
            out = jnp.dot(onehot, tab_ref[...],
                          preferred_element_type=jnp.float32)             # (CR, G*D)
            out_ref[pl.ds(r0, chunk_rows), :] = out.astype(out_ref.dtype)

        if num_chunks == 1:
            compute_chunk(0)
        else:
            def body(c, carry):
                compute_chunk(pl.multiple_of(c * chunk_rows, chunk_rows))
                return carry
            jax.lax.fori_loop(0, num_chunks, body, 0)

    return kernel


def line_introducer_forward(placeholder, table):
    """Pallas equivalent of LineIntroducer.forward(placeholder)."""
    orig_shape = placeholder.shape
    n = int(np.prod(orig_shape))
    vocab, d_model = table.shape
    itemsize = jnp.dtype(table.dtype).itemsize

    # Lane folding: pack G tokens per 128-lane output row when d_model < 128.
    if d_model < 128 and 128 % d_model == 0:
        g = 128 // d_model
    else:
        g = 1  # d_model >= 128 (multiples of 128 are already lane-dense)

    n_rows = -(-n // g)
    row_bytes = g * d_model * itemsize

    # ~1 MiB of output per buffer; the BlockSpec pipeline double-buffers it.
    target_rows = max(8, (1 << 20) // row_bytes)
    if target_rows >= 256:
        tile_cap = (target_rows // 256) * 256
    else:
        tile_cap = (target_rows // 8) * 8

    if n_rows >= tile_cap:
        tile_rows = tile_cap
    else:
        tile_rows = _round_up(n_rows, 8)
        if tile_rows > 256:
            tile_rows = _round_up(tile_rows, 256)
    chunk_rows = min(tile_rows, 256)          # bounds per-chunk one-hot footprint
    num_chunks = tile_rows // chunk_rows
    n_rows_pad = _round_up(n_rows, tile_rows)
    grid = (n_rows_pad // tile_rows,)

    # Fold G indices per row; padded tokens get index 0 and are trimmed below.
    idx_flat = placeholder.reshape(-1).astype(jnp.int32)
    idx_flat = jnp.pad(idx_flat, (0, n_rows_pad * g - n))
    idx = idx_flat.reshape(n_rows_pad, g)

    # Block-diagonal table with G copies: (G*vocab, G*d_model).
    if g > 1:
        bd_table = jnp.kron(jnp.eye(g, dtype=table.dtype), table)
    else:
        bd_table = table

    kernel = _make_kernel(chunk_rows, num_chunks, vocab)

    out_folded = pl.pallas_call(
        kernel,
        out_shape=jax.ShapeDtypeStruct((n_rows_pad, g * d_model), table.dtype),
        grid_spec=pltpu.PrefetchScalarGridSpec(
            num_scalar_prefetch=0,
            grid=grid,
            in_specs=[
                pl.BlockSpec((tile_rows, g), lambda i: (i, 0)),
                pl.BlockSpec((g * vocab, g * d_model), lambda i: (0, 0)),
            ],
            out_specs=pl.BlockSpec((tile_rows, g * d_model), lambda i: (i, 0)),
        ),
        compiler_params=pltpu.CompilerParams(
            dimension_semantics=("parallel",),
        ),
    )(idx, bd_table)

    out = out_folded.reshape(n_rows_pad * g, d_model)[:n]
    return out.reshape(*orig_shape, d_model)


if __name__ == "__main__":
    key = jax.random.PRNGKey(0)
    k_tab, k_idx, k_tab2, k_idx2 = jax.random.split(key, 4)

    # Small shapes consistent with the module (d_model=32 exercises the G=4
    # lane-folded path).
    d_model, batch, seq = 32, 2, 8
    table = jax.random.normal(k_tab, (VOCAB, d_model), dtype=jnp.float32)
    placeholder = jax.random.randint(k_idx, (batch, seq), 0, VOCAB, dtype=jnp.int32)

    out = jax.block_until_ready(line_introducer_forward(placeholder, table))
    ref = jnp.take(table, placeholder, axis=0)
    assert out.shape == (batch, seq, d_model)
    assert out.dtype == table.dtype
    np.testing.assert_allclose(np.asarray(out), np.asarray(ref), rtol=1e-6, atol=1e-6)

    # Larger check exercising the tiled path (grid > 1, multi-chunk, G=1).
    d_model2, batch2, seq2 = 128, 2, 1100
    table2 = jax.random.normal(k_tab2, (VOCAB, d_model2), dtype=jnp.float32)
    placeholder2 = jax.random.randint(k_idx2, (batch2, seq2), 0, VOCAB, dtype=jnp.int32)

    out2 = jax.block_until_ready(line_introducer_forward(placeholder2, table2))
    ref2 = jnp.take(table2, placeholder2, axis=0)
    np.testing.assert_allclose(np.asarray(out2), np.asarray(ref2), rtol=1e-6, atol=1e-6)

    print("KERNEL_OK")
</pallas_src>

<mosaic_0001>
module attributes {stable_mosaic.version = 11 : i64} {
  func.func @kernel(%arg0: i32, %arg1: memref<8x4xi32, #tpu.memory_space<vmem>>, %arg2: memref<64x128xf32, #tpu.memory_space<vmem>>, %arg3: memref<8x128xf32, #tpu.memory_space<vmem>>) attributes {dimension_semantics = [#tpu.dimension_semantics<parallel>], iteration_bounds = array<i64: 1>, scalar_prefetch = 0 : i64, scratch_operands = 0 : i64, tpu.core_type = #tpu.core_type<tc>, window_params = [{transform_indices = @transform_0, window_bounds = array<i64: 8, 4>}, {pipeline_mode = #tpu.pipeline_mode<synchronous>, transform_indices = @transform_1, window_bounds = array<i64: 64, 128>}, {transform_indices = @transform_2, window_bounds = array<i64: 8, 128>}]} {
    %c0 = arith.constant 0 : index
    %c0_0 = arith.constant 0 : index
    %0 = vector.load %arg1[%c0, %c0_0] : memref<8x4xi32, #tpu.memory_space<vmem>>, vector<8x4xi32>
    %1 = tpu.iota {dimensions = array<i32: 1>} : vector<8x64xi32>
    %2 = vector.extract_strided_slice %0 {offsets = [0, 0], sizes = [8, 1], strides = [1, 1]} : vector<8x4xi32> to vector<8x1xi32>
    %3 = vector.broadcast %2 : vector<8x1xi32> to vector<8x64xi32>
    %4 = arith.cmpi eq, %1, %3 : vector<8x64xi32>
    %5 = arith.extui %4 : vector<8x64xi1> to vector<8x64xi32>
    %6 = arith.sitofp %5 : vector<8x64xi32> to vector<8x64xf32>
    %7 = vector.extract_strided_slice %0 {offsets = [0, 1], sizes = [8, 1], strides = [1, 1]} : vector<8x4xi32> to vector<8x1xi32>
    %c16_i32 = arith.constant 16 : i32
    %8 = vector.broadcast %c16_i32 : i32 to vector<8x1xi32>
    %9 = arith.addi %7, %8 : vector<8x1xi32>
    %10 = vector.broadcast %9 : vector<8x1xi32> to vector<8x64xi32>
    %11 = arith.cmpi eq, %1, %10 : vector<8x64xi32>
    %12 = arith.extui %11 : vector<8x64xi1> to vector<8x64xi32>
    %13 = arith.sitofp %12 : vector<8x64xi32> to vector<8x64xf32>
    %14 = arith.addf %6, %13 : vector<8x64xf32>
    %15 = vector.extract_strided_slice %0 {offsets = [0, 2], sizes = [8, 1], strides = [1, 1]} : vector<8x4xi32> to vector<8x1xi32>
    %c32_i32 = arith.constant 32 : i32
    %16 = vector.broadcast %c32_i32 : i32 to vector<8x1xi32>
    %17 = arith.addi %15, %16 : vector<8x1xi32>
    %18 = vector.broadcast %17 : vector<8x1xi32> to vector<8x64xi32>
    %19 = arith.cmpi eq, %1, %18 : vector<8x64xi32>
    %20 = arith.extui %19 : vector<8x64xi1> to vector<8x64xi32>
    %21 = arith.sitofp %20 : vector<8x64xi32> to vector<8x64xf32>
    %22 = arith.addf %14, %21 : vector<8x64xf32>
    %23 = vector.extract_strided_slice %0 {offsets = [0, 3], sizes = [8, 1], strides = [1, 1]} : vector<8x4xi32> to vector<8x1xi32>
    %c48_i32 = arith.constant 48 : i32
    %24 = vector.broadcast %c48_i32 : i32 to vector<8x1xi32>
    %25 = arith.addi %23, %24 : vector<8x1xi32>
    %26 = vector.broadcast %25 : vector<8x1xi32> to vector<8x64xi32>
    %27 = arith.cmpi eq, %1, %26 : vector<8x64xi32>
    %28 = arith.extui %27 : vector<8x64xi1> to vector<8x64xi32>
    %29 = arith.sitofp %28 : vector<8x64xi32> to vector<8x64xf32>
    %30 = arith.addf %22, %29 : vector<8x64xf32>
    %c0_1 = arith.constant 0 : index
    %c0_2 = arith.constant 0 : index
    %31 = vector.load %arg2[%c0_1, %c0_2] : memref<64x128xf32, #tpu.memory_space<vmem>>, vector<64x128xf32>
    %cst = arith.constant dense<0.000000e+00> : vector<8x128xf32>
    %32 = tpu.matmul %30, %31, %cst {dimension_numbers = #tpu.dot_dimension_numbers<[1], [0], [0], [1], [0, 0, 1, 1], [], []>} : vector<8x64xf32>, vector<64x128xf32>, vector<8x128xf32> -> vector<8x128xf32>
    %c0_3 = arith.constant 0 : index
    %c0_4 = arith.constant 0 : index
    %33 = vector.load %arg3[%c0_3, %c0_4] : memref<8x128xf32, #tpu.memory_space<vmem>>, vector<8x128xf32>
    tpu.vector_store %arg3[%c0_3, %c0_4], %32 {strides = array<i32>} : memref<8x128xf32, #tpu.memory_space<vmem>>, vector<8x128xf32>,
    return
  }
  func.func @transform_0(%arg0: i32) -> (i32, i32) {
    %c0_i32 = arith.constant 0 : i32
    %c0_i32_0 = arith.constant 0 : i32
    return %arg0, %c0_i32 : i32, i32
  }
  func.func @transform_1(%arg0: i32) -> (i32, i32) {
    %c0_i32 = arith.constant 0 : i32
    %c0_i32_0 = arith.constant 0 : i32
    %c0_i32_1 = arith.constant 0 : i32
    return %c0_i32, %c0_i32_0 : i32, i32
  }
  func.func @transform_2(%arg0: i32) -> (i32, i32) {
    %c0_i32 = arith.constant 0 : i32
    %c0_i32_0 = arith.constant 0 : i32
    return %arg0, %c0_i32 : i32, i32
  }
}

</mosaic_0001>

<llo_original>
// kernel: tpu_custom_call.1
$region0: #{tpu_custom_call.1}
  #allocation0 [shape = 'u32[]', space=smem, size = 0x4, offset = 0x4, fixed_abs, tag = 'smem constant byte address 0x4 - core index']
  #allocation1 [shape = 'u32[144,128]{1,0:T(1,128)}', space=vmem, size = 0x12000, scoped, tag = 'internal scratch']
  %s0 = inlined_call_operand.vmem [shape: s32[8,4], index: 0, kind: input, shape index: {}]
  %s1 = inlined_call_operand.hbm [shape: f32[64,128], index: 1, kind: input, shape index: {}]
  %s2 = inlined_call_operand.hbm [shape: f32[8,128], index: 2, kind: output, shape index: {}]
  %s3 = sld [smem:[#allocation0]]
  $region22: #{tpu_custom_call.1} parent=0
    _
  %s5 = ssub.s32 1, %s3
  %s6 = scalar_select 0, %s5, %s3
  $region1: #{tpu_custom_call.1} parent=0
    #allocation2 [shape = 'u8[32768]{0}', space=vmem, size = 0x8000, scoped, tag = 'input window, operand 1, single buffered']
    #allocation3 [shape = 's32[1]{0}', space=sflag, size = 0x4, scoped, tag = 'scoped memory for tpu_custom_call.1']
    #allocation4 [shape = 's32[1]{0}', space=sflag, size = 0x4, scoped, tag = 'scoped memory for tpu_custom_call.1']
    #allocation5 [shape = 'u8[4096]{0}', space=vmem, size = 0x1000, scoped, tag = 'output window, operand 0, single buffered']
    %7 = vsyncpa [#allocation3], 0
    %8 = vsyncpa [#allocation4], 0
    // Predicated region
    $region2: #{tpu_custom_call.1} parent=1 // pred_check
      _
    $region3: #{tpu_custom_call.1} parent=1 // pred_check_branch
      %10 = sbr.rel (0) target = $region5
    $region4: #{tpu_custom_call.1} parent=1 // pred_region
      _
    $region5: #{tpu_custom_call.1} parent=1 // pred_fallthru
      _
    // Predicated region
    $region6: #{tpu_custom_call.1} parent=1 // pred_check
      _
    $region7: #{tpu_custom_call.1} parent=1 // pred_check_branch
      %12 = sbr.rel (0) target = $region9
    $region8: #{tpu_custom_call.1} parent=1 // pred_region
      %s14 = ssub.s32 1024, 1024
      %15 = vsyncadd [#allocation3], %s14
      %s16 = sshll.u32 [#allocation2], 4
      %s17 = int_to_ptr.vmem [resolvable:$true] %s16
      %22 = dma.hbm_to_vmem [thread:$0]  %s1, 1024, %s17, [#allocation3], 128, 128, 8
    $region9: #{tpu_custom_call.1} parent=1 // pred_fallthru
      _
    // Predicated region
    $region10: #{tpu_custom_call.1} parent=1 // pred_check
      _
    $region11: #{tpu_custom_call.1} parent=1 // pred_check_branch
      %24 = sbr.rel (0) target = $region13
    $region12: #{tpu_custom_call.1} parent=1 // pred_region
      %25 = dma.done [#allocation3], 1024
    $region13: #{tpu_custom_call.1} parent=1 // pred_fallthru
      _
    %v26 = vld [vmem:[%s0] sm:$0xff]
    %v27 = vlaneseq
    %v28 = vand.u32 %v27, 127
    %29 = vset.pattern.permute.xlu0 0
    %30 = vperm.xlu0 %29, %v26
    %v31 = vpop.permute.xlu0 %30
    %vm32 = vcmp.eq.s32.totalorder %v28, %v31
    %v33 = vsel %vm32, 1, 0
    %v34 = vcvt.s32.f32 %v33
    %v35 = vadd.s32 %v26, 16
    %36 = vset.pattern.permute.xlu0 1
    %37 = vperm.xlu0 %36, %v35
    %v38 = vpop.permute.xlu0 %37
    %vm39 = vcmp.eq.s32.totalorder %v28, %v38
    %v40 = vsel %vm39, 1, 0
    %v41 = vcvt.s32.f32 %v40
    %v42 = vadd.f32 %v34, %v41
    %v43 = vadd.s32 %v26, 32
    %44 = vset.pattern.permute.xlu0 2
    %45 = vperm.xlu0 %44, %v43
    %v46 = vpop.permute.xlu0 %45
    %vm47 = vcmp.eq.s32.totalorder %v28, %v46
    %v48 = vsel %vm47, 1, 0
    %v49 = vcvt.s32.f32 %v48
    %v50 = vadd.f32 %v42, %v49
    %v51 = vadd.s32 %v26, 48
    %52 = vset.pattern.permute.xlu0 3
    %53 = vperm.xlu0 %52, %v51
    %v54 = vpop.permute.xlu0 %53
    %vm55 = vcmp.eq.s32.totalorder %v28, %v54
    %v56 = vsel %vm55, 1, 0
    %v57 = vcvt.s32.f32 %v56
    %v58 = vadd.f32 %v50, %v57
    %v59 = vld [vmem:[#allocation2] sm:$0xff]
    %v60 = vld [vmem:[#allocation2 + $0x8] sm:$0xff]
    %v61 = vld [vmem:[#allocation2 + $0x10] sm:$0xff]
    %v62 = vld [vmem:[#allocation2 + $0x18] sm:$0xff]
    %v63 = vld [vmem:[#allocation2 + $0x20] sm:$0xff]
    %v64 = vld [vmem:[#allocation2 + $0x28] sm:$0xff]
    %v65 = vld [vmem:[#allocation2 + $0x30] sm:$0xff]
    %v66 = vld [vmem:[#allocation2 + $0x38] sm:$0xff]
    %vm67 = vcmask 523264
    %v69 = vsel %vm67, %v58, 0
    %71 = vmatprep.subr.mxu0 0.0
    %72 = vmatpush1.msra.mxu0 %v59
    %73 = vmatprep.subr.mxu0 0.0
    %74 = vmatpush1.msra.mxu0 %v60
    %75 = vmatprep.subr.mxu0 0.0
    %76 = vmatpush1.msra.mxu0 %v61
    %77 = vmatprep.subr.mxu0 0.0
    %78 = vmatpush1.msra.mxu0 %v62
    %79 = vmatprep.subr.mxu0 0.0
    %80 = vmatpush1.msra.mxu0 %v63
    %81 = vmatprep.subr.mxu0 0.0
    %82 = vmatpush1.msra.mxu0 %v64
    %83 = vmatprep.subr.mxu0 0.0
    %84 = vmatpush1.msra.mxu0 %v65
    %85 = vmatprep.subr.mxu0 0.0
    %86 = vmatpush1.msra.mxu0 %v66
    %87 = vmatprep.subr.mxu0 0.0
    %88 = vmatpush1.msra.mxu0 0.0
    %89 = vmatprep.subr.mxu0 0.0
    %90 = vmatpush1.msra.mxu0 0.0
    %91 = vmatprep.subr.mxu0 0.0
    %92 = vmatpush1.msra.mxu0 0.0
    %93 = vmatprep.subr.mxu0 0.0
    %94 = vmatpush1.msra.mxu0 0.0
    %95 = vmatprep.subr.mxu0 0.0
    %96 = vmatpush1.msra.mxu0 0.0
    %97 = vmatprep.subr.mxu0 0.0
    %98 = vmatpush1.msra.mxu0 0.0
    %99 = vmatprep.subr.mxu0 0.0
    %100 = vmatpush1.msra.mxu0 0.0
    %101 = vmatprep.subr.mxu0 0.0
    %102 = vmatpush1.msra.mxu0 0.0
    %103 = vmatprep.subr.mxu0 0.0
    %104 = vmatpush1.msra.mxu0 0.0
    %105 = vmatprep.subr.mxu0 0.0
    %106 = vmatpush1.msra.mxu0 0.0
    %107 = vmatprep.subr.mxu0 0.0
    %108 = vmatpush1.msra.mxu0 0.0
    %109 = vmatprep.subr.mxu0 0.0
    %110 = vmatpush1.msra.mxu0 0.0
    %111 = vmatprep.subr.mxu0 0.0
    %112 = vmatpush1.msra.mxu0 0.0
    %113 = vmatprep.subr.mxu0 0.0
    %114 = vmatpush1.msra.mxu0 0.0
    %115 = vmatprep.subr.mxu0 0.0
    %116 = vmatpush1.msra.mxu0 0.0
    %117 = vmatprep.subr.mxu0 0.0
    %118 = vmatpush1.msra.mxu0 0.0
    %119 = vmatprep.subr.mxu0 0.0
    %120 = vmatpush1.msra.mxu0 0.0
    %121 = vmatprep.subr.mxu0 0.0
    %122 = vmatpush1.msra.mxu0 0.0
    %123 = vmatprep.subr.mxu0 0.0
    %124 = vmatpush1.msra.mxu0 0.0
    %125 = vmatprep.subr.mxu0 0.0
    %126 = vmatpush1.msra.mxu0 0.0
    %127 = vmatprep.subr.mxu0 0.0
    %128 = vmatpush1.msra.mxu0 0.0
    %129 = vmatprep.subr.mxu0 0.0
    %130 = vmatpush1.msra.mxu0 0.0
    %131 = vmatprep.subr.mxu0 0.0
    %132 = vmatpush1.msra.mxu0 0.0
    %133 = vmatprep.subr.mxu0 0.0
    %134 = vmatpush1.msra.mxu0 0.0
    %135 = vmatprep.mubr.f32.mxu0 0.0
    %136 = vmatmul.mubr.f32.gmra.mrb[0].mxu0 %v69
    %v137 = vpop.f32.mrb[0].mxu0
    %v138 = vadd.f32 0.0, %v137
    %v139 = vpop.f32.mrb[0].mxu0
    %140 = vdwg.mxu0
    %141 = vst [vmem:[#allocation5] sm:$0xff] %v138
    // Predicated region
    $region14: #{tpu_custom_call.1} parent=1 // pred_check
      _
    $region15: #{tpu_custom_call.1} parent=1 // pred_check_branch
      %143 = sbr.rel (0) target = $region17
    $region16: #{tpu_custom_call.1} parent=1 // pred_region
      %s145 = ssub.s32 128, 128
      %146 = vsyncadd [#allocation4], %s145
      %s148 = sshll.u32 [#allocation5], 4
      %s149 = int_to_ptr.vmem [resolvable:$true] %s148
      %151 = dma.vmem_to_hbm [thread:$0]  %s149, 128, %s2, [#allocation4]
    $region17: #{tpu_custom_call.1} parent=1 // pred_fallthru
      _
    // Predicated region
    $region18: #{tpu_custom_call.1} parent=1 // pred_check
      _
    $region19: #{tpu_custom_call.1} parent=1 // pred_check_branch
      %153 = sbr.rel (0) target = $region21
    $region20: #{tpu_custom_call.1} parent=1 // pred_region
      %154 = dma.done [#allocation4], 128
    $region21: #{tpu_custom_call.1} parent=1 // pred_fallthru
      _
    %155 = vsyncpa [#allocation3], 1
    %156 = vsyncpa [#allocation4], 1

</llo_original>
